<compile_context>
chip_gen: v6e
topology: v6e:2x2x1
jax: 0.10.0
libtpu: 0.0.40
codegen_flags: <defaults>
</compile_context>

<pallas_src>
import functools

import jax
import jax.numpy as jnp
from jax.experimental import pallas as pl
from jax.experimental.pallas import tpu as pltpu


def _channel_attn_kernel(x_ref, w1t_ref, w2t_ref, o_ref, *, hw):
    # x_ref : (Bt, C, HW) block of the input, native dtype
    # w1t   : (C, C_red)  fc1 1x1-conv weight, pre-transposed
    # w2t   : (C_red, C)  fc2 1x1-conv weight, pre-transposed
    xb = x_ref[...]

    inv_hw = 1.0 / float(hw)                                    # hoisted constant
    # Global average pool: accumulate in f32 even for bf16 inputs.
    avg = jnp.sum(xb, axis=-1, dtype=jnp.float32) * inv_hw      # (Bt, C)
    # Global max pool: exact in the native dtype; upcast only the (Bt, C) result.
    mx = jnp.max(xb, axis=-1).astype(jnp.float32)               # (Bt, C)

    w1t = w1t_ref[...].astype(jnp.float32)                      # (C, C_red)
    w2t = w2t_ref[...].astype(jnp.float32)                      # (C_red, C)
    # fc1 + ReLU per branch; shared fc2 (linear, bias-free => fc2(a)+fc2(b)=fc2(a+b)).
    h = (jnp.maximum(jnp.dot(avg, w1t, preferred_element_type=jnp.float32), 0.0)
         + jnp.maximum(jnp.dot(mx, w1t, preferred_element_type=jnp.float32), 0.0))
    logits = jnp.dot(h, w2t, preferred_element_type=jnp.float32)    # (Bt, C)

    # Scale math in f32; apply in the native dtype (no full-tile f32 temporary).
    scale = jax.nn.sigmoid(logits).astype(xb.dtype)[:, :, None]     # (Bt, C, 1)
    o_ref[...] = (xb * scale).astype(o_ref.dtype)


def channel_attn(x, w1, w2, *, block_b=None, donate_x=False):
    """CBAM channel attention.

    x : (B, C, H, W)   input feature map (f32 or bf16)
    w1: (C // r, C)    fc1 1x1-conv weight (squeezed)
    w2: (C, C // r)    fc2 1x1-conv weight (squeezed)
    """
    B, C, H, W = x.shape
    HW = H * W
    C_red = w1.shape[0]

    x_flat = x.reshape(B, C, HW)            # free under XLA (metadata reshape)
    itemsize = jnp.dtype(x.dtype).itemsize
    per_b_bytes = C * HW * itemsize
    w_bytes = (w1.size + w2.size) * jnp.dtype(jnp.float32).itemsize

    # --- generation-aware VMEM budget / tile target -------------------------
    try:
        vmem_cap = int(getattr(pltpu.get_tpu_info(), "vmem_capacity_bytes",
                               64 << 20))
    except Exception:                       # conservative fallback (v7x-sized)
        vmem_cap = 64 << 20
    if vmem_cap <= (64 << 20):              # v7x: 64 MiB per TensorCore
        target_tile_bytes = 6 << 20
        vmem_request_cap = 48 << 20         # headroom for Mosaic internal scratch
    else:                                   # v5e / v6e: 128 MiB physical VMEM
        target_tile_bytes = 4 << 20
        vmem_request_cap = 96 << 20
    margin = 8 << 20                        # internal scratch / f32 temporaries

    # --- batch-block size ----------------------------------------------------
    # input + output blocks are each double-buffered => ~4 tiles of VMEM.
    budget = vmem_request_cap - 2 * w_bytes - margin
    bt_vmem = max(1, budget // (4 * per_b_bytes))
    bt_tile = max(1, target_tile_bytes // per_b_bytes)
    bt = int(max(1, min(B, bt_vmem, bt_tile)))
    # Prefer >= 4 grid steps (2 per TensorCore on 2-TC chips) when B allows,
    # but never shrink tiles below ~1 MiB to get them.
    bt_floor = max(1, (1 << 20) // per_b_bytes)
    desired_steps = min(B, 4)
    if pl.cdiv(B, bt) < desired_steps and bt > bt_floor:
        bt = int(max(bt_floor, B // desired_steps))
    if block_b is not None:                 # explicit override (tests / tuning)
        bt = int(max(1, min(B, block_b)))
    grid = (pl.cdiv(B, bt),)                # partial last block is fine: the pools
                                            # and the MLP are per-batch-row, so OOB
                                            # garbage only lands in discarded rows.
    # TODO(synk): add an HW-chunked two-pass path (stats-reduction pass + scale
    # apply pass) for shapes where even bt=1 exceeds the VMEM budget (one
    # (C, H*W) slab too large to double-buffer, mainly on v7x's 64 MiB VMEM).

    tile_bytes = bt * per_b_bytes
    vmem_bytes = int(min(vmem_request_cap,
                         max(32 << 20, 4 * tile_bytes + 4 * w_bytes + margin)))

    io_aliases = {0: 0} if donate_x else {}

    w1t = jnp.asarray(w1).T                 # (C, C_red)
    w2t = jnp.asarray(w2).T                 # (C_red, C)
    kernel = functools.partial(_channel_attn_kernel, hw=HW)

    cost = pl.CostEstimate(
        flops=int(6 * B * C * C_red + 4 * B * C * HW),
        transcendentals=int(B * C),
        bytes_accessed=int(2 * B * per_b_bytes + 2 * w_bytes))

    out_flat = pl.pallas_call(
        kernel,
        out_shape=jax.ShapeDtypeStruct((B, C, HW), x.dtype),
        grid_spec=pltpu.PrefetchScalarGridSpec(
            num_scalar_prefetch=0,
            grid=grid,
            in_specs=[
                pl.BlockSpec((bt, C, HW), lambda b: (b, 0, 0)),
                pl.BlockSpec(w1t.shape, lambda b: (0, 0)),
                pl.BlockSpec(w2t.shape, lambda b: (0, 0)),
            ],
            out_specs=pl.BlockSpec((bt, C, HW), lambda b: (b, 0, 0)),
        ),
        compiler_params=pltpu.CompilerParams(
            dimension_semantics=("parallel",),
            vmem_limit_bytes=vmem_bytes),
        cost_estimate=cost,
        input_output_aliases=io_aliases,
    )(x_flat, w1t, w2t)

    return out_flat.reshape(B, C, H, W)


def _reference(x, w1, w2):
    # Pure-JAX reference matching the PyTorch forward semantics.
    avg = jnp.mean(x, axis=(2, 3))                    # (B, C)
    mx = jnp.max(x, axis=(2, 3))                      # (B, C)

    def mlp(p):
        h = jnp.maximum(p @ w1.T, 0.0)                # (B, C_red)
        return h @ w2.T                               # (B, C)

    scale = jax.nn.sigmoid(mlp(avg) + mlp(mx))[:, :, None, None]
    return x * scale


if __name__ == "__main__":
    key = jax.random.PRNGKey(0)

    # Test 1: f32, HW already a multiple of 128.
    B, C, H, W, reduction = 2, 64, 16, 16, 16
    C_red = C // reduction
    kx, k1, k2 = jax.random.split(key, 3)
    x = jax.random.normal(kx, (B, C, H, W), dtype=jnp.float32)
    w1 = jax.random.normal(k1, (C_red, C), dtype=jnp.float32) * (1.0 / C) ** 0.5
    w2 = jax.random.normal(k2, (C, C_red), dtype=jnp.float32) * (1.0 / C_red) ** 0.5

    out = jax.block_until_ready(channel_attn(x, w1, w2))
    ref = _reference(x, w1, w2)
    assert out.shape == (B, C, H, W)
    assert jnp.allclose(out, ref, atol=1e-5, rtol=1e-5), "f32 mismatch vs reference"

    # Test 2: f32, odd spatial size (HW=196, not a multiple of 128; no wrapper pad).
    B2, C2, H2, W2, red2 = 3, 32, 14, 14, 8
    kx2, k12, k22 = jax.random.split(jax.random.PRNGKey(1), 3)
    x2 = jax.random.normal(kx2, (B2, C2, H2, W2), dtype=jnp.float32)
    w1b = jax.random.normal(k12, (C2 // red2, C2), dtype=jnp.float32) * (1.0 / C2) ** 0.5
    w2b = jax.random.normal(k22, (C2, C2 // red2), dtype=jnp.float32) * (1.0 / (C2 // red2)) ** 0.5
    out2 = jax.block_until_ready(channel_attn(x2, w1b, w2b))
    ref2 = _reference(x2, w1b, w2b)
    assert jnp.allclose(out2, ref2, atol=1e-5, rtol=1e-5), "odd-HW mismatch vs reference"

    # Test 3: bf16 input path (pools / MLP in f32, apply in bf16).
    xb16 = x.astype(jnp.bfloat16)
    out_b = jax.block_until_ready(channel_attn(xb16, w1, w2))
    ref_b = _reference(xb16.astype(jnp.float32), w1, w2)
    assert out_b.dtype == jnp.bfloat16
    assert float(jnp.max(jnp.abs(out_b.astype(jnp.float32) - ref_b))) < 0.1, "bf16 mismatch"

    # Test 4: non-divisible batch with a forced block size -> partial last block
    # via the cdiv grid (B=5, block_b=2 -> grid of 3 steps, last one partial).
    kx5 = jax.random.PRNGKey(2)
    x5 = jax.random.normal(kx5, (5, C2, H2, W2), dtype=jnp.float32)
    out5 = jax.block_until_ready(channel_attn(x5, w1b, w2b, block_b=2))
    ref5 = _reference(x5, w1b, w2b)
    assert jnp.allclose(out5, ref5, atol=1e-5, rtol=1e-5), "partial-block mismatch"

    print("KERNEL_OK")
</pallas_src>

<mosaic_0001>
module attributes {stable_mosaic.version = 11 : i64} {
  func.func @_channel_attn_kernel(%arg0: i32, %arg1: memref<2x64x256xf32, #tpu.memory_space<vmem>>, %arg2: memref<64x4xf32, #tpu.memory_space<vmem>>, %arg3: memref<4x64xf32, #tpu.memory_space<vmem>>, %arg4: memref<2x64x256xf32, #tpu.memory_space<vmem>>) attributes {dimension_semantics = [#tpu.dimension_semantics<parallel>], iteration_bounds = array<i64: 1>, scalar_prefetch = 0 : i64, scratch_operands = 0 : i64, tpu.core_type = #tpu.core_type<tc>, window_params = [{transform_indices = @transform_0, window_bounds = array<i64: 2, 64, 256>}, {pipeline_mode = #tpu.pipeline_mode<synchronous>, transform_indices = @transform_1, window_bounds = array<i64: 64, 4>}, {pipeline_mode = #tpu.pipeline_mode<synchronous>, transform_indices = @transform_2, window_bounds = array<i64: 4, 64>}, {transform_indices = @transform_3, window_bounds = array<i64: 2, 64, 256>}]} {
    %c0 = arith.constant 0 : index
    %c0_0 = arith.constant 0 : index
    %c0_1 = arith.constant 0 : index
    %0 = vector.load %arg1[%c0, %c0_0, %c0_1] : memref<2x64x256xf32, #tpu.memory_space<vmem>>, vector<2x64x256xf32>
    %cst = arith.constant dense<0.000000e+00> : vector<2x64xf32>
    %1 = vector.multi_reduction <add>, %0, %cst [2] : vector<2x64x256xf32> to vector<2x64xf32>
    %cst_2 = arith.constant 3.906250e-03 : f32
    %2 = vector.broadcast %cst_2 : f32 to vector<2x64xf32>
    %3 = arith.mulf %1, %2 : vector<2x64xf32>
    %cst_3 = arith.constant dense<0xFF800000> : vector<2x64xf32>
    %4 = vector.multi_reduction <maximumf>, %0, %cst_3 [2] : vector<2x64x256xf32> to vector<2x64xf32>
    %c0_4 = arith.constant 0 : index
    %c0_5 = arith.constant 0 : index
    %5 = vector.load %arg2[%c0_4, %c0_5] : memref<64x4xf32, #tpu.memory_space<vmem>>, vector<64x4xf32>
    %c0_6 = arith.constant 0 : index
    %c0_7 = arith.constant 0 : index
    %6 = vector.load %arg3[%c0_6, %c0_7] : memref<4x64xf32, #tpu.memory_space<vmem>>, vector<4x64xf32>
    %cst_8 = arith.constant dense<0.000000e+00> : vector<2x4xf32>
    %7 = tpu.matmul %3, %5, %cst_8 {dimension_numbers = #tpu.dot_dimension_numbers<[1], [0], [0], [1], [0, 0, 1, 1], [], []>} : vector<2x64xf32>, vector<64x4xf32>, vector<2x4xf32> -> vector<2x4xf32>
    %cst_9 = arith.constant 0.000000e+00 : f32
    %8 = vector.broadcast %cst_9 : f32 to vector<2x4xf32>
    %9 = arith.maximumf %7, %8 : vector<2x4xf32>
    %cst_10 = arith.constant dense<0.000000e+00> : vector<2x4xf32>
    %10 = tpu.matmul %4, %5, %cst_10 {dimension_numbers = #tpu.dot_dimension_numbers<[1], [0], [0], [1], [0, 0, 1, 1], [], []>} : vector<2x64xf32>, vector<64x4xf32>, vector<2x4xf32> -> vector<2x4xf32>
    %cst_11 = arith.constant 0.000000e+00 : f32
    %11 = vector.broadcast %cst_11 : f32 to vector<2x4xf32>
    %12 = arith.maximumf %10, %11 : vector<2x4xf32>
    %13 = arith.addf %9, %12 : vector<2x4xf32>
    %cst_12 = arith.constant dense<0.000000e+00> : vector<2x64xf32>
    %14 = tpu.matmul %13, %6, %cst_12 {dimension_numbers = #tpu.dot_dimension_numbers<[1], [0], [0], [1], [0, 0, 1, 1], [], []>} : vector<2x4xf32>, vector<4x64xf32>, vector<2x64xf32> -> vector<2x64xf32>
    %15 = arith.negf %14 : vector<2x64xf32>
    %16 = math.exp %15 : vector<2x64xf32>
    %cst_13 = arith.constant 1.000000e+00 : f32
    %17 = vector.broadcast %cst_13 : f32 to vector<2x64xf32>
    %18 = arith.addf %17, %16 : vector<2x64xf32>
    %19 = arith.divf %17, %18 : vector<2x64xf32>
    %20 = vector.shape_cast %19 : vector<2x64xf32> to vector<2x64x1xf32>
    %21 = vector.broadcast %20 : vector<2x64x1xf32> to vector<2x64x256xf32>
    %22 = arith.mulf %0, %21 : vector<2x64x256xf32>
    %c0_14 = arith.constant 0 : index
    %c0_15 = arith.constant 0 : index
    %c0_16 = arith.constant 0 : index
    %23 = vector.load %arg4[%c0_14, %c0_15, %c0_16] : memref<2x64x256xf32, #tpu.memory_space<vmem>>, vector<2x64x256xf32>
    tpu.vector_store %arg4[%c0_14, %c0_15, %c0_16], %22 {strides = array<i32>} : memref<2x64x256xf32, #tpu.memory_space<vmem>>, vector<2x64x256xf32>,
    return
  }
  func.func @transform_0(%arg0: i32) -> (i32, i32, i32) {
    %c0_i32 = arith.constant 0 : i32
    %c0_i32_0 = arith.constant 0 : i32
    %c0_i32_1 = arith.constant 0 : i32
    return %arg0, %c0_i32, %c0_i32_0 : i32, i32, i32
  }
  func.func @transform_1(%arg0: i32) -> (i32, i32) {
    %c0_i32 = arith.constant 0 : i32
    %c0_i32_0 = arith.constant 0 : i32
    %c0_i32_1 = arith.constant 0 : i32
    return %c0_i32, %c0_i32_0 : i32, i32
  }
  func.func @transform_2(%arg0: i32) -> (i32, i32) {
    %c0_i32 = arith.constant 0 : i32
    %c0_i32_0 = arith.constant 0 : i32
    %c0_i32_1 = arith.constant 0 : i32
    return %c0_i32, %c0_i32_0 : i32, i32
  }
  func.func @transform_3(%arg0: i32) -> (i32, i32, i32) {
    %c0_i32 = arith.constant 0 : i32
    %c0_i32_0 = arith.constant 0 : i32
    %c0_i32_1 = arith.constant 0 : i32
    return %arg0, %c0_i32, %c0_i32_0 : i32, i32, i32
  }
}

</mosaic_0001>

<llo_original>
// kernel: tpu_custom_call.1
$region0: #{tpu_custom_call.1}
  #allocation0 [shape = 'u32[]', space=smem, size = 0x4, offset = 0x4, fixed_abs, tag = 'smem constant byte address 0x4 - core index']
  #allocation1 [shape = 'u32[144,128]{1,0:T(1,128)}', space=vmem, size = 0x12000, scoped, tag = 'internal scratch']
  %s0 = inlined_call_operand.hbm [shape: f32[2,64,256], index: 0, kind: input, shape index: {}]
  %s1 = inlined_call_operand.vmem [shape: f32[64,4], index: 1, kind: input, shape index: {}]
  %s2 = inlined_call_operand.vmem [shape: f32[4,64], index: 2, kind: input, shape index: {}]
  %s3 = inlined_call_operand.hbm [shape: f32[2,64,256], index: 3, kind: output, shape index: {}]
  %s4 = sld [smem:[#allocation0]]
  $region26: #{tpu_custom_call.1} parent=0
    _
  %s6 = ssub.s32 1, %s4
  %s7 = scalar_select 0, %s6, %s4
  $region1: #{tpu_custom_call.1} parent=0
    #allocation2 [shape = 'u8[131072]{0}', space=vmem, size = 0x20000, scoped, tag = 'input window, operand 0, single buffered']
    #allocation3 [shape = 's32[1]{0}', space=sflag, size = 0x4, scoped, tag = 'scoped memory for tpu_custom_call.1']
    #allocation4 [shape = 's32[1]{0}', space=sflag, size = 0x4, scoped, tag = 'scoped memory for tpu_custom_call.1']
    #allocation5 [shape = 'u8[131072]{0}', space=vmem, size = 0x20000, scoped, tag = 'output window, operand 0, single buffered']
    %8 = vsyncpa [#allocation3], 0
    %9 = vsyncpa [#allocation4], 0
    // Predicated region
    $region2: #{tpu_custom_call.1} parent=1 // pred_check
      _
    $region3: #{tpu_custom_call.1} parent=1 // pred_check_branch
      %11 = sbr.rel (0) target = $region5
    $region4: #{tpu_custom_call.1} parent=1 // pred_region
      %s13 = ssub.s32 4096, 4096
      %14 = vsyncadd [#allocation3], %s13
      %s15 = sshll.u32 [#allocation2], 4
      %s16 = int_to_ptr.vmem [resolvable:$true] %s15
      %21 = dma.hbm_to_vmem [thread:$0]  %s0, 4096, %s16, [#allocation3], 256, 256, 16
    $region5: #{tpu_custom_call.1} parent=1 // pred_fallthru
      _
    // Predicated region
    $region6: #{tpu_custom_call.1} parent=1 // pred_check
      _
    $region7: #{tpu_custom_call.1} parent=1 // pred_check_branch
      %23 = sbr.rel (0) target = $region9
    $region8: #{tpu_custom_call.1} parent=1 // pred_region
      _
    $region9: #{tpu_custom_call.1} parent=1 // pred_fallthru
      _
    // Predicated region
    $region10: #{tpu_custom_call.1} parent=1 // pred_check
      _
    $region11: #{tpu_custom_call.1} parent=1 // pred_check_branch
      %25 = sbr.rel (0) target = $region13
    $region12: #{tpu_custom_call.1} parent=1 // pred_region
      _
    $region13: #{tpu_custom_call.1} parent=1 // pred_fallthru
      _
    // Predicated region
    $region14: #{tpu_custom_call.1} parent=1 // pred_check
      _
    $region15: #{tpu_custom_call.1} parent=1 // pred_check_branch
      %27 = sbr.rel (0) target = $region17
    $region16: #{tpu_custom_call.1} parent=1 // pred_region
      %28 = dma.done [#allocation3], 4096
    $region17: #{tpu_custom_call.1} parent=1 // pred_fallthru
      _
    %v29 = vld [vmem:[#allocation2] sm:$0xff]
    %v30 = vld [vmem:[#allocation2 + $0x8] sm:$0xff]
    %v31 = vld [vmem:[#allocation2 + $0x10] sm:$0xff]
    %v32 = vld [vmem:[#allocation2 + $0x18] sm:$0xff]
    %v33 = vld [vmem:[#allocation2 + $0x20] sm:$0xff]
    %v34 = vld [vmem:[#allocation2 + $0x28] sm:$0xff]
    %v35 = vld [vmem:[#allocation2 + $0x30] sm:$0xff]
    %v36 = vld [vmem:[#allocation2 + $0x38] sm:$0xff]
    %v37 = vld [vmem:[#allocation2 + $0x40] sm:$0xff]
    %v38 = vld [vmem:[#allocation2 + $0x48] sm:$0xff]
    %v39 = vld [vmem:[#allocation2 + $0x50] sm:$0xff]
    %v40 = vld [vmem:[#allocation2 + $0x58] sm:$0xff]
    %v41 = vld [vmem:[#allocation2 + $0x60] sm:$0xff]
    %v42 = vld [vmem:[#allocation2 + $0x68] sm:$0xff]
    %v43 = vld [vmem:[#allocation2 + $0x70] sm:$0xff]
    %v44 = vld [vmem:[#allocation2 + $0x78] sm:$0xff]
    %v45 = vld [vmem:[#allocation2 + $0x80] sm:$0xff]
    %v46 = vld [vmem:[#allocation2 + $0x88] sm:$0xff]
    %v47 = vld [vmem:[#allocation2 + $0x90] sm:$0xff]
    %v48 = vld [vmem:[#allocation2 + $0x98] sm:$0xff]
    %v49 = vld [vmem:[#allocation2 + $0xa0] sm:$0xff]
    %v50 = vld [vmem:[#allocation2 + $0xa8] sm:$0xff]
    %v51 = vld [vmem:[#allocation2 + $0xb0] sm:$0xff]
    %v52 = vld [vmem:[#allocation2 + $0xb8] sm:$0xff]
    %v53 = vld [vmem:[#allocation2 + $0xc0] sm:$0xff]
    %v54 = vld [vmem:[#allocation2 + $0xc8] sm:$0xff]
    %v55 = vld [vmem:[#allocation2 + $0xd0] sm:$0xff]
    %v56 = vld [vmem:[#allocation2 + $0xd8] sm:$0xff]
    %v57 = vld [vmem:[#allocation2 + $0xe0] sm:$0xff]
    %v58 = vld [vmem:[#allocation2 + $0xe8] sm:$0xff]
    %v59 = vld [vmem:[#allocation2 + $0xf0] sm:$0xff]
    %v60 = vld [vmem:[#allocation2 + $0xf8] sm:$0xff]
    %v61 = vadd.f32 %v29, %v30
    %62 = vadd.xlane.f32.xlu0 %v61
    %v63 = vpop.xlane.xlu0 %62
    %v64 = vadd.f32 %v31, %v32
    %65 = vadd.xlane.f32.xlu0 %v64
    %v66 = vpop.xlane.xlu0 %65
    %v67 = vadd.f32 %v33, %v34
    %68 = vadd.xlane.f32.xlu0 %v67
    %v69 = vpop.xlane.xlu0 %68
    %v70 = vadd.f32 %v35, %v36
    %71 = vadd.xlane.f32.xlu0 %v70
    %v72 = vpop.xlane.xlu0 %71
    %v73 = vadd.f32 %v37, %v38
    %74 = vadd.xlane.f32.xlu0 %v73
    %v75 = vpop.xlane.xlu0 %74
    %v76 = vadd.f32 %v39, %v40
    %77 = vadd.xlane.f32.xlu0 %v76
    %v78 = vpop.xlane.xlu0 %77
    %v79 = vadd.f32 %v41, %v42
    %80 = vadd.xlane.f32.xlu0 %v79
    %v81 = vpop.xlane.xlu0 %80
    %v82 = vadd.f32 %v43, %v44
    %83 = vadd.xlane.f32.xlu0 %v82
    %v84 = vpop.xlane.xlu0 %83
    %v85 = vadd.f32 %v45, %v46
    %86 = vadd.xlane.f32.xlu0 %v85
    %v87 = vpop.xlane.xlu0 %86
    %v88 = vadd.f32 %v47, %v48
    %89 = vadd.xlane.f32.xlu0 %v88
    %v90 = vpop.xlane.xlu0 %89
    %v91 = vadd.f32 %v49, %v50
    %92 = vadd.xlane.f32.xlu0 %v91
    %v93 = vpop.xlane.xlu0 %92
    %v94 = vadd.f32 %v51, %v52
    %95 = vadd.xlane.f32.xlu0 %v94
    %v96 = vpop.xlane.xlu0 %95
    %v97 = vadd.f32 %v53, %v54
    %98 = vadd.xlane.f32.xlu0 %v97
    %v99 = vpop.xlane.xlu0 %98
    %v100 = vadd.f32 %v55, %v56
    %101 = vadd.xlane.f32.xlu0 %v100
    %v102 = vpop.xlane.xlu0 %101
    %v103 = vadd.f32 %v57, %v58
    %104 = vadd.xlane.f32.xlu0 %v103
    %v105 = vpop.xlane.xlu0 %104
    %v106 = vadd.f32 %v59, %v60
    %107 = vadd.xlane.f32.xlu0 %v106
    %v108 = vpop.xlane.xlu0 %107
    %v109 = vmul.f32 %v63, 0.00390625
    %v110 = vmul.f32 %v66, 0.00390625
    %v111 = vmul.f32 %v69, 0.00390625
    %v112 = vmul.f32 %v72, 0.00390625
    %v113 = vmul.f32 %v75, 0.00390625
    %v114 = vmul.f32 %v78, 0.00390625
    %v115 = vmul.f32 %v81, 0.00390625
    %v116 = vmul.f32 %v84, 0.00390625
    %v117 = vmul.f32 %v87, 0.00390625
    %v118 = vmul.f32 %v90, 0.00390625
    %v119 = vmul.f32 %v93, 0.00390625
    %v120 = vmul.f32 %v96, 0.00390625
    %v121 = vmul.f32 %v99, 0.00390625
    %v122 = vmul.f32 %v102, 0.00390625
    %v123 = vmul.f32 %v105, 0.00390625
    %v124 = vmul.f32 %v108, 0.00390625
    %v125 = vmax.f32 %v29, %v30
    %126 = vmax.xlane.f32.xlu0 %v125
    %v127 = vpop.xlane.xlu0 %126
    %v128 = vmax.f32 %v31, %v32
    %129 = vmax.xlane.f32.xlu0 %v128
    %v130 = vpop.xlane.xlu0 %129
    %v131 = vmax.f32 %v33, %v34
    %132 = vmax.xlane.f32.xlu0 %v131
    %v133 = vpop.xlane.xlu0 %132
    %v134 = vmax.f32 %v35, %v36
    %135 = vmax.xlane.f32.xlu0 %v134
    %v136 = vpop.xlane.xlu0 %135
    %v137 = vmax.f32 %v37, %v38
    %138 = vmax.xlane.f32.xlu0 %v137
    %v139 = vpop.xlane.xlu0 %138
    %v140 = vmax.f32 %v39, %v40
    %141 = vmax.xlane.f32.xlu0 %v140
    %v142 = vpop.xlane.xlu0 %141
    %v143 = vmax.f32 %v41, %v42
    %144 = vmax.xlane.f32.xlu0 %v143
    %v145 = vpop.xlane.xlu0 %144
    %v146 = vmax.f32 %v43, %v44
    %147 = vmax.xlane.f32.xlu0 %v146
    %v148 = vpop.xlane.xlu0 %147
    %v149 = vmax.f32 %v45, %v46
    %150 = vmax.xlane.f32.xlu0 %v149
    %v151 = vpop.xlane.xlu0 %150
    %v152 = vmax.f32 %v47, %v48
    %153 = vmax.xlane.f32.xlu0 %v152
    %v154 = vpop.xlane.xlu0 %153
    %v155 = vmax.f32 %v49, %v50
    %156 = vmax.xlane.f32.xlu0 %v155
    %v157 = vpop.xlane.xlu0 %156
    %v158 = vmax.f32 %v51, %v52
    %159 = vmax.xlane.f32.xlu0 %v158
    %v160 = vpop.xlane.xlu0 %159
    %v161 = vmax.f32 %v53, %v54
    %162 = vmax.xlane.f32.xlu0 %v161
    %v163 = vpop.xlane.xlu0 %162
    %v164 = vmax.f32 %v55, %v56
    %165 = vmax.xlane.f32.xlu0 %v164
    %v166 = vpop.xlane.xlu0 %165
    %v167 = vmax.f32 %v57, %v58
    %168 = vmax.xlane.f32.xlu0 %v167
    %v169 = vpop.xlane.xlu0 %168
    %v170 = vmax.f32 %v59, %v60
    %171 = vmax.xlane.f32.xlu0 %v170
    %v172 = vpop.xlane.xlu0 %171
    %v173 = vld [vmem:[%s1] sm:$0xff]
    %v174 = vld [vmem:[%s1 + $0x8] sm:$0xff]
    %v175 = vld [vmem:[%s1 + $0x10] sm:$0xff]
    %v176 = vld [vmem:[%s1 + $0x18] sm:$0xff]
    %v177 = vld [vmem:[%s1 + $0x20] sm:$0xff]
    %v178 = vld [vmem:[%s1 + $0x28] sm:$0xff]
    %v179 = vld [vmem:[%s1 + $0x30] sm:$0xff]
    %v180 = vld [vmem:[%s1 + $0x38] sm:$0xff]
    %v181 = vld [vmem:[%s2] sm:$0xf]
    %v198 = vlaneseq
    %v199 = vand.u32 %v198, 127
    %v200 = vlaneseq
    %v201 = vshrl.u32 %v200, 7
    %v202 = vsub.s32 %v199, %v201
    %v203 = vrot.slane %v109, %v202
    %v204 = vadd.s32 %v199, 4294967288
    %v205 = vlaneseq
    %v206 = vshrl.u32 %v205, 7
    %v207 = vsub.s32 %v204, %v206
    %v208 = vrot.slane %v110, %v207
    %vm209 = vcmask 130112
    %v210 = vsel %vm209, %v208, %v203
    %v211 = vadd.s32 %v199, 4294967280
    %v212 = vlaneseq
    %v213 = vshrl.u32 %v212, 7
    %v214 = vsub.s32 %v211, %v213
    %v215 = vrot.slane %v111, %v214
    %vm216 = vcmask 195712
    %v217 = vsel %vm216, %v215, %v210
    %v218 = vadd.s32 %v199, 4294967272
    %v219 = vlaneseq
    %v220 = vshrl.u32 %v219, 7
    %v221 = vsub.s32 %v218, %v220
    %v222 = vrot.slane %v112, %v221
    %vm223 = vcmask 261312
    %v224 = vsel %vm223, %v222, %v217
    %v225 = vadd.s32 %v199, 4294967264
    %v226 = vlaneseq
    %v227 = vshrl.u32 %v226, 7
    %v228 = vsub.s32 %v225, %v227
    %v229 = vrot.slane %v113, %v228
    %vm230 = vcmask 326912
    %v231 = vsel %vm230, %v229, %v224
    %v232 = vadd.s32 %v199, 4294967256
    %v233 = vlaneseq
    %v234 = vshrl.u32 %v233, 7
    %v235 = vsub.s32 %v232, %v234
    %v236 = vrot.slane %v114, %v235
    %vm237 = vcmask 392512
    %v238 = vsel %vm237, %v236, %v231
    %v239 = vadd.s32 %v199, 4294967248
    %v240 = vlaneseq
    %v241 = vshrl.u32 %v240, 7
    %v242 = vsub.s32 %v239, %v241
    %v243 = vrot.slane %v115, %v242
    %vm244 = vcmask 458112
    %v245 = vsel %vm244, %v243, %v238
    %v246 = vadd.s32 %v199, 4294967240
    %v247 = vlaneseq
    %v248 = vshrl.u32 %v247, 7
    %v249 = vsub.s32 %v246, %v248
    %v250 = vrot.slane %v116, %v249
    %vm251 = vcmask 523712
    %v252 = vsel %vm251, %v250, %v245
    %v253 = vlaneseq
    %v254 = vshrl.u32 %v253, 7
    %v255 = vsub.s32 %v199, %v254
    %v256 = vrot.slane %v117, %v255
    %v257 = vlaneseq
    %v258 = vshrl.u32 %v257, 7
    %v259 = vsub.s32 %v204, %v258
    %v260 = vrot.slane %v118, %v259
    %v261 = vsel %vm209, %v260, %v256
    %v262 = vlaneseq
    %v263 = vshrl.u32 %v262, 7
    %v264 = vsub.s32 %v211, %v263
    %v265 = vrot.slane %v119, %v264
    %v266 = vsel %vm216, %v265, %v261
    %v267 = vlaneseq
    %v268 = vshrl.u32 %v267, 7
    %v269 = vsub.s32 %v218, %v268
    %v270 = vrot.slane %v120, %v269
    %v271 = vsel %vm223, %v270, %v266
    %v272 = vlaneseq
    %v273 = vshrl.u32 %v272, 7
    %v274 = vsub.s32 %v225, %v273
    %v275 = vrot.slane %v121, %v274
    %v276 = vsel %vm230, %v275, %v271
    %v277 = vlaneseq
    %v278 = vshrl.u32 %v277, 7
    %v279 = vsub.s32 %v232, %v278
    %v280 = vrot.slane %v122, %v279
    %v281 = vsel %vm237, %v280, %v276
    %v282 = vlaneseq
    %v283 = vshrl.u32 %v282, 7
    %v284 = vsub.s32 %v239, %v283
    %v285 = vrot.slane %v123, %v284
    %v286 = vsel %vm244, %v285, %v281
    %v287 = vlaneseq
    %v288 = vshrl.u32 %v287, 7
    %v289 = vsub.s32 %v246, %v288
    %v290 = vrot.slane %v124, %v289
    %v291 = vsel %vm251, %v290, %v286
    %vm292 = vcmask 1041409
    %v293 = vsel %vm292, %v291, %v252
    %vm294 = vcmask 523264
    %v295 = vsel %vm294, %v293, 0
    %297 = vmatprep.subr.mxu0 0.0
    %298 = vmatpush1.msra.mxu0 0.0
    %299 = vmatprep.subr.mxu0 0.0
    %300 = vmatpush1.msra.mxu0 0.0
    %301 = vmatprep.subr.mxu0 0.0
    %302 = vmatpush1.msra.mxu0 0.0
    %303 = vmatprep.subr.mxu0 0.0
    %304 = vmatpush1.msra.mxu0 0.0
    %305 = vmatprep.subr.mxu0 0.0
    %306 = vmatpush1.msra.mxu0 0.0
    %307 = vmatprep.subr.mxu0 0.0
    %308 = vmatpush1.msra.mxu0 0.0
    %309 = vmatprep.subr.mxu0 0.0
    %310 = vmatpush1.msra.mxu0 0.0
    %311 = vmatprep.subr.mxu0 0.0
    %312 = vmatpush1.msra.mxu0 0.0
    %313 = vmatprep.subr.mxu0 0.0
    %314 = vmatpush1.msra.mxu0 %v180
    %315 = vmatprep.subr.mxu0 0.0
    %316 = vmatpush1.msra.mxu0 %v179
    %317 = vmatprep.subr.mxu0 0.0
    %318 = vmatpush1.msra.mxu0 %v178
    %319 = vmatprep.subr.mxu0 0.0
    %320 = vmatpush1.msra.mxu0 %v177
    %321 = vmatprep.subr.mxu0 0.0
    %322 = vmatpush1.msra.mxu0 %v176
    %323 = vmatprep.subr.mxu0 0.0
    %324 = vmatpush1.msra.mxu0 %v175
    %325 = vmatprep.subr.mxu0 0.0
    %326 = vmatpush1.msra.mxu0 %v174
    %327 = vmatprep.subr.mxu0 0.0
    %328 = vmatpush1.msra.mxu0 %v173
    %329 = vmatprep.subr.mxu0 0.0
    %330 = vmatpush2.msra.mxu0 0.0
    %331 = vmatprep.subr.mxu0 0.0
    %332 = vmatpush2.msra.mxu0 0.0
    %333 = vmatprep.subr.mxu0 0.0
    %334 = vmatpush2.msra.mxu0 0.0
    %335 = vmatprep.subr.mxu0 0.0
    %336 = vmatpush2.msra.mxu0 0.0
    %337 = vmatprep.subr.mxu0 0.0
    %338 = vmatpush2.msra.mxu0 0.0
    %339 = vmatprep.subr.mxu0 0.0
    %340 = vmatpush2.msra.mxu0 0.0
    %341 = vmatprep.subr.mxu0 0.0
    %342 = vmatpush2.msra.mxu0 0.0
    %343 = vmatprep.subr.mxu0 0.0
    %344 = vmatpush2.msra.mxu0 0.0
    %345 = vmatprep.subr.mxu0 0.0
    %346 = vmatpush2.msra.mxu0 0.0
    %347 = vmatprep.subr.mxu0 0.0
    %348 = vmatpush2.msra.mxu0 0.0
    %349 = vmatprep.subr.mxu0 0.0
    %350 = vmatpush2.msra.mxu0 0.0
    %351 = vmatprep.subr.mxu0 0.0
    %352 = vmatpush2.msra.mxu0 0.0
    %353 = vmatprep.subr.mxu0 0.0
    %354 = vmatpush2.msra.mxu0 0.0
    %355 = vmatprep.subr.mxu0 0.0
    %356 = vmatpush2.msra.mxu0 0.0
    %357 = vmatprep.subr.mxu0 0.0
    %358 = vmatpush2.msra.mxu0 0.0
    %359 = vmatprep.subr.mxu0 0.0
    %360 = vmatpush2.msra.mxu0 0.0
    %361 = vmatprep.mubr.f32.mxu0 0.0
    %362 = vmatmul.mubr.f32.gmra.mxu0 %v295
    %v363 = vpop.f32.mrf.mxu0
    %v364 = vadd.f32 0.0, %v363
    %v365 = vpop.f32.mrf.mxu0
    %366 = vdwg.mxu0
    %v367 = vmax.f32 %v364, 0.0
    %v384 = vlaneseq
    %v385 = vshrl.u32 %v384, 7
    %v386 = vsub.s32 %v199, %v385
    %v387 = vrot.slane %v127, %v386
    %v388 = vlaneseq
    %v389 = vshrl.u32 %v388, 7
    %v390 = vsub.s32 %v204, %v389
    %v391 = vrot.slane %v130, %v390
    %v392 = vsel %vm209, %v391, %v387
    %v393 = vlaneseq
    %v394 = vshrl.u32 %v393, 7
    %v395 = vsub.s32 %v211, %v394
    %v396 = vrot.slane %v133, %v395
    %v397 = vsel %vm216, %v396, %v392
    %v398 = vlaneseq
    %v399 = vshrl.u32 %v398, 7
    %v400 = vsub.s32 %v218, %v399
    %v401 = vrot.slane %v136, %v400
    %v402 = vsel %vm223, %v401, %v397
    %v403 = vlaneseq
    %v404 = vshrl.u32 %v403, 7
    %v405 = vsub.s32 %v225, %v404
    %v406 = vrot.slane %v139, %v405
    %v407 = vsel %vm230, %v406, %v402
    %v408 = vlaneseq
    %v409 = vshrl.u32 %v408, 7
    %v410 = vsub.s32 %v232, %v409
    %v411 = vrot.slane %v142, %v410
    %v412 = vsel %vm237, %v411, %v407
    %v413 = vlaneseq
    %v414 = vshrl.u32 %v413, 7
    %v415 = vsub.s32 %v239, %v414
    %v416 = vrot.slane %v145, %v415
    %v417 = vsel %vm244, %v416, %v412
    %v418 = vlaneseq
    %v419 = vshrl.u32 %v418, 7
    %v420 = vsub.s32 %v246, %v419
    %v421 = vrot.slane %v148, %v420
    %v422 = vsel %vm251, %v421, %v417
    %v423 = vlaneseq
    %v424 = vshrl.u32 %v423, 7
    %v425 = vsub.s32 %v199, %v424
    %v426 = vrot.slane %v151, %v425
    %v427 = vlaneseq
    %v428 = vshrl.u32 %v427, 7
    %v429 = vsub.s32 %v204, %v428
    %v430 = vrot.slane %v154, %v429
    %v431 = vsel %vm209, %v430, %v426
    %v432 = vlaneseq
    %v433 = vshrl.u32 %v432, 7
    %v434 = vsub.s32 %v211, %v433
    %v435 = vrot.slane %v157, %v434
    %v436 = vsel %vm216, %v435, %v431
    %v437 = vlaneseq
    %v438 = vshrl.u32 %v437, 7
    %v439 = vsub.s32 %v218, %v438
    %v440 = vrot.slane %v160, %v439
    %v441 = vsel %vm223, %v440, %v436
    %v442 = vlaneseq
    %v443 = vshrl.u32 %v442, 7
    %v444 = vsub.s32 %v225, %v443
    %v445 = vrot.slane %v163, %v444
    %v446 = vsel %vm230, %v445, %v441
    %v447 = vlaneseq
    %v448 = vshrl.u32 %v447, 7
    %v449 = vsub.s32 %v232, %v448
    %v450 = vrot.slane %v166, %v449
    %v451 = vsel %vm237, %v450, %v446
    %v452 = vlaneseq
    %v453 = vshrl.u32 %v452, 7
    %v454 = vsub.s32 %v239, %v453
    %v455 = vrot.slane %v169, %v454
    %v456 = vsel %vm244, %v455, %v451
    %v457 = vlaneseq
    %v458 = vshrl.u32 %v457, 7
    %v459 = vsub.s32 %v246, %v458
    %v460 = vrot.slane %v172, %v459
    %v461 = vsel %vm251, %v460, %v456
    %v462 = vsel %vm292, %v461, %v422
    %v463 = vsel %vm294, %v462, 0
    %465 = vmatprep.subr.mxu0 0.0
    %466 = vmatpush1.msra.mxu0 0.0
    %467 = vmatprep.subr.mxu0 0.0
    %468 = vmatpush1.msra.mxu0 0.0
    %469 = vmatprep.subr.mxu0 0.0
    %470 = vmatpush1.msra.mxu0 0.0
    %471 = vmatprep.subr.mxu0 0.0
    %472 = vmatpush1.msra.mxu0 0.0
    %473 = vmatprep.subr.mxu0 0.0
    %474 = vmatpush1.msra.mxu0 0.0
    %475 = vmatprep.subr.mxu0 0.0
    %476 = vmatpush1.msra.mxu0 0.0
    %477 = vmatprep.subr.mxu0 0.0
    %478 = vmatpush1.msra.mxu0 0.0
    %479 = vmatprep.subr.mxu0 0.0
    %480 = vmatpush1.msra.mxu0 0.0
    %481 = vmatprep.subr.mxu0 0.0
    %482 = vmatpush1.msra.mxu0 %v180
    %483 = vmatprep.subr.mxu0 0.0
    %484 = vmatpush1.msra.mxu0 %v179
    %485 = vmatprep.subr.mxu0 0.0
    %486 = vmatpush1.msra.mxu0 %v178
    %487 = vmatprep.subr.mxu0 0.0
    %488 = vmatpush1.msra.mxu0 %v177
    %489 = vmatprep.subr.mxu0 0.0
    %490 = vmatpush1.msra.mxu0 %v176
    %491 = vmatprep.subr.mxu0 0.0
    %492 = vmatpush1.msra.mxu0 %v175
    %493 = vmatprep.subr.mxu0 0.0
    %494 = vmatpush1.msra.mxu0 %v174
    %495 = vmatprep.subr.mxu0 0.0
    %496 = vmatpush1.msra.mxu0 %v173
    %497 = vmatprep.subr.mxu0 0.0
    %498 = vmatpush2.msra.mxu0 0.0
    %499 = vmatprep.subr.mxu0 0.0
    %500 = vmatpush2.msra.mxu0 0.0
    %501 = vmatprep.subr.mxu0 0.0
    %502 = vmatpush2.msra.mxu0 0.0
    %503 = vmatprep.subr.mxu0 0.0
    %504 = vmatpush2.msra.mxu0 0.0
    %505 = vmatprep.subr.mxu0 0.0
    %506 = vmatpush2.msra.mxu0 0.0
    %507 = vmatprep.subr.mxu0 0.0
    %508 = vmatpush2.msra.mxu0 0.0
    %509 = vmatprep.subr.mxu0 0.0
    %510 = vmatpush2.msra.mxu0 0.0
    %511 = vmatprep.subr.mxu0 0.0
    %512 = vmatpush2.msra.mxu0 0.0
    %513 = vmatprep.subr.mxu0 0.0
    %514 = vmatpush2.msra.mxu0 0.0
    %515 = vmatprep.subr.mxu0 0.0
    %516 = vmatpush2.msra.mxu0 0.0
    %517 = vmatprep.subr.mxu0 0.0
    %518 = vmatpush2.msra.mxu0 0.0
    %519 = vmatprep.subr.mxu0 0.0
    %520 = vmatpush2.msra.mxu0 0.0
    %521 = vmatprep.subr.mxu0 0.0
    %522 = vmatpush2.msra.mxu0 0.0
    %523 = vmatprep.subr.mxu0 0.0
    %524 = vmatpush2.msra.mxu0 0.0
    %525 = vmatprep.subr.mxu0 0.0
    %526 = vmatpush2.msra.mxu0 0.0
    %527 = vmatprep.subr.mxu0 0.0
    %528 = vmatpush2.msra.mxu0 0.0
    %529 = vmatprep.mubr.f32.mxu0 0.0
    %530 = vmatmul.mubr.f32.gmra.mxu0 %v463
    %v531 = vpop.f32.mrf.mxu0
    %v532 = vadd.f32 0.0, %v531
    %v533 = vpop.f32.mrf.mxu0
    %534 = vdwg.mxu0
    %v535 = vmax.f32 %v532, 0.0
    %v536 = vadd.f32 %v367, %v535
    %vm537 = vcmask 31744
    %v539 = vsel %vm537, %v536, 0
    %vm541 = vcmask 1043456
    %v543 = vsel %vm541, %v181, 0
    %545 = vmatprep.subr.mxu0 0.0
    %546 = vmatpush1.msra.mxu0 0.0
    %547 = vmatprep.subr.mxu0 0.0
    %548 = vmatpush1.msra.mxu0 0.0
    %549 = vmatprep.subr.mxu0 0.0
    %550 = vmatpush1.msra.mxu0 0.0
    %551 = vmatprep.subr.mxu0 0.0
    %552 = vmatpush1.msra.mxu0 0.0
    %553 = vmatprep.subr.mxu0 0.0
    %554 = vmatpush1.msra.mxu0 0.0
    %555 = vmatprep.subr.mxu0 0.0
    %556 = vmatpush1.msra.mxu0 0.0
    %557 = vmatprep.subr.mxu0 0.0
    %558 = vmatpush1.msra.mxu0 0.0
    %559 = vmatprep.subr.mxu0 0.0
    %560 = vmatpush1.msra.mxu0 0.0
    %561 = vmatprep.subr.mxu0 0.0
    %562 = vmatpush1.msra.mxu0 0.0
    %563 = vmatprep.subr.mxu0 0.0
    %564 = vmatpush1.msra.mxu0 0.0
    %565 = vmatprep.subr.mxu0 0.0
    %566 = vmatpush1.msra.mxu0 0.0
    %567 = vmatprep.subr.mxu0 0.0
    %568 = vmatpush1.msra.mxu0 0.0
    %569 = vmatprep.subr.mxu0 0.0
    %570 = vmatpush1.msra.mxu0 0.0
    %571 = vmatprep.subr.mxu0 0.0
    %572 = vmatpush1.msra.mxu0 0.0
    %573 = vmatprep.subr.mxu0 0.0
    %574 = vmatpush1.msra.mxu0 0.0
    %575 = vmatprep.subr.mxu0 0.0
    %576 = vmatpush1.msra.mxu0 %v543
    %577 = vmatprep.subr.mxu0 0.0
    %578 = vmatpush2.msra.mxu0 0.0
    %579 = vmatprep.subr.mxu0 0.0
    %580 = vmatpush2.msra.mxu0 0.0
    %581 = vmatprep.subr.mxu0 0.0
    %582 = vmatpush2.msra.mxu0 0.0
    %583 = vmatprep.subr.mxu0 0.0
    %584 = vmatpush2.msra.mxu0 0.0
    %585 = vmatprep.subr.mxu0 0.0
    %586 = vmatpush2.msra.mxu0 0.0
    %587 = vmatprep.subr.mxu0 0.0
    %588 = vmatpush2.msra.mxu0 0.0
    %589 = vmatprep.subr.mxu0 0.0
    %590 = vmatpush2.msra.mxu0 0.0
    %591 = vmatprep.subr.mxu0 0.0
    %592 = vmatpush2.msra.mxu0 0.0
    %593 = vmatprep.subr.mxu0 0.0
    %594 = vmatpush2.msra.mxu0 0.0
    %595 = vmatprep.subr.mxu0 0.0
    %596 = vmatpush2.msra.mxu0 0.0
    %597 = vmatprep.subr.mxu0 0.0
    %598 = vmatpush2.msra.mxu0 0.0
    %599 = vmatprep.subr.mxu0 0.0
    %600 = vmatpush2.msra.mxu0 0.0
    %601 = vmatprep.subr.mxu0 0.0
    %602 = vmatpush2.msra.mxu0 0.0
    %603 = vmatprep.subr.mxu0 0.0
    %604 = vmatpush2.msra.mxu0 0.0
    %605 = vmatprep.subr.mxu0 0.0
    %606 = vmatpush2.msra.mxu0 0.0
    %607 = vmatprep.subr.mxu0 0.0
    %608 = vmatpush2.msra.mxu0 0.0
    %609 = vmatprep.mubr.f32.mxu0 0.0
    %610 = vmatmul.mubr.f32.gmra.mxu0 %v539
    %v611 = vpop.f32.mrf.mxu0
    %v612 = vadd.f32 0.0, %v611
    %v613 = vpop.f32.mrf.mxu0
    %614 = vdwg.mxu0
    %v615 = vxor.u32 %v612, 2147483648
    %v616 = vmul.f32 %v615, 1.442695
    %v617 = vpow.pop %v616
    %v618 = vadd.f32 %v617, 1.0
    %v619 = vrcp.pop %v618
    %v620 = vmul.f32 1.0, %v619
    %v621 = vlaneseq
    %v622 = vshrl.u32 %v621, 7
    %v623 = vsub.s32 0, %v622
    %v624 = vrot.slane %v620, %v623
    %626 = vbcast.lane.b32.xlu0 %v624, 256
    %v627 = vpop.permute.xlu0 %626
    %s629 = sor.u32 256, 8
    %630 = vbcast.lane.b32.xlu0 %v624, %s629
    %v631 = vpop.permute.xlu0 %630
    %s633 = sor.u32 256, 16
    %634 = vbcast.lane.b32.xlu0 %v624, %s633
    %v635 = vpop.permute.xlu0 %634
    %s637 = sor.u32 256, 24
    %638 = vbcast.lane.b32.xlu0 %v624, %s637
    %v639 = vpop.permute.xlu0 %638
    %s641 = sor.u32 256, 32
    %642 = vbcast.lane.b32.xlu0 %v624, %s641
    %v643 = vpop.permute.xlu0 %642
    %s645 = sor.u32 256, 40
    %646 = vbcast.lane.b32.xlu0 %v624, %s645
    %v647 = vpop.permute.xlu0 %646
    %s649 = sor.u32 256, 48
    %650 = vbcast.lane.b32.xlu0 %v624, %s649
    %v651 = vpop.permute.xlu0 %650
    %s653 = sor.u32 256, 56
    %654 = vbcast.lane.b32.xlu0 %v624, %s653
    %v655 = vpop.permute.xlu0 %654
    %v656 = vlaneseq
    %v657 = vshrl.u32 %v656, 7
    %v658 = vsub.s32 1, %v657
    %v659 = vrot.slane %v620, %v658
    %661 = vbcast.lane.b32.xlu0 %v659, 256
    %v662 = vpop.permute.xlu0 %661
    %s664 = sor.u32 256, 8
    %665 = vbcast.lane.b32.xlu0 %v659, %s664
    %v666 = vpop.permute.xlu0 %665
    %s668 = sor.u32 256, 16
    %669 = vbcast.lane.b32.xlu0 %v659, %s668
    %v670 = vpop.permute.xlu0 %669
    %s672 = sor.u32 256, 24
    %673 = vbcast.lane.b32.xlu0 %v659, %s672
    %v674 = vpop.permute.xlu0 %673
    %s676 = sor.u32 256, 32
    %677 = vbcast.lane.b32.xlu0 %v659, %s676
    %v678 = vpop.permute.xlu0 %677
    %s680 = sor.u32 256, 40
    %681 = vbcast.lane.b32.xlu0 %v659, %s680
    %v682 = vpop.permute.xlu0 %681
    %s684 = sor.u32 256, 48
    %685 = vbcast.lane.b32.xlu0 %v659, %s684
    %v686 = vpop.permute.xlu0 %685
    %s688 = sor.u32 256, 56
    %689 = vbcast.lane.b32.xlu0 %v659, %s688
    %v690 = vpop.permute.xlu0 %689
    %v691 = vmul.f32 %v29, %v627
    %v692 = vmul.f32 %v30, %v627
    %v693 = vmul.f32 %v31, %v631
    %v694 = vmul.f32 %v32, %v631
    %v695 = vmul.f32 %v33, %v635
    %v696 = vmul.f32 %v34, %v635
    %v697 = vmul.f32 %v35, %v639
    %v698 = vmul.f32 %v36, %v639
    %v699 = vmul.f32 %v37, %v643
    %v700 = vmul.f32 %v38, %v643
    %v701 = vmul.f32 %v39, %v647
    %v702 = vmul.f32 %v40, %v647
    %v703 = vmul.f32 %v41, %v651
    %v704 = vmul.f32 %v42, %v651
    %v705 = vmul.f32 %v43, %v655
    %v706 = vmul.f32 %v44, %v655
    %v707 = vmul.f32 %v45, %v662
    %v708 = vmul.f32 %v46, %v662
    %v709 = vmul.f32 %v47, %v666
    %v710 = vmul.f32 %v48, %v666
    %v711 = vmul.f32 %v49, %v670
    %v712 = vmul.f32 %v50, %v670
    %v713 = vmul.f32 %v51, %v674
    %v714 = vmul.f32 %v52, %v674
    %v715 = vmul.f32 %v53, %v678
    %v716 = vmul.f32 %v54, %v678
    %v717 = vmul.f32 %v55, %v682
    %v718 = vmul.f32 %v56, %v682
    %v719 = vmul.f32 %v57, %v686
    %v720 = vmul.f32 %v58, %v686
    %v721 = vmul.f32 %v59, %v690
    %v722 = vmul.f32 %v60, %v690
    %723 = vst [vmem:[#allocation5] sm:$0xff] %v691
    %724 = vst [vmem:[#allocation5 + $0x8] sm:$0xff] %v692
    %725 = vst [vmem:[#allocation5 + $0x10] sm:$0xff] %v693
    %726 = vst [vmem:[#allocation5 + $0x18] sm:$0xff] %v694
    %727 = vst [vmem:[#allocation5 + $0x20] sm:$0xff] %v695
    %728 = vst [vmem:[#allocation5 + $0x28] sm:$0xff] %v696
    %729 = vst [vmem:[#allocation5 + $0x30] sm:$0xff] %v697
    %730 = vst [vmem:[#allocation5 + $0x38] sm:$0xff] %v698
    %731 = vst [vmem:[#allocation5 + $0x40] sm:$0xff] %v699
    %732 = vst [vmem:[#allocation5 + $0x48] sm:$0xff] %v700
    %733 = vst [vmem:[#allocation5 + $0x50] sm:$0xff] %v701
    %734 = vst [vmem:[#allocation5 + $0x58] sm:$0xff] %v702
    %735 = vst [vmem:[#allocation5 + $0x60] sm:$0xff] %v703
    %736 = vst [vmem:[#allocation5 + $0x68] sm:$0xff] %v704
    %737 = vst [vmem:[#allocation5 + $0x70] sm:$0xff] %v705
    %738 = vst [vmem:[#allocation5 + $0x78] sm:$0xff] %v706
    %739 = vst [vmem:[#allocation5 + $0x80] sm:$0xff] %v707
    %740 = vst [vmem:[#allocation5 + $0x88] sm:$0xff] %v708
    %741 = vst [vmem:[#allocation5 + $0x90] sm:$0xff] %v709
    %742 = vst [vmem:[#allocation5 + $0x98] sm:$0xff] %v710
    %743 = vst [vmem:[#allocation5 + $0xa0] sm:$0xff] %v711
    %744 = vst [vmem:[#allocation5 + $0xa8] sm:$0xff] %v712
    %745 = vst [vmem:[#allocation5 + $0xb0] sm:$0xff] %v713
    %746 = vst [vmem:[#allocation5 + $0xb8] sm:$0xff] %v714
    %747 = vst [vmem:[#allocation5 + $0xc0] sm:$0xff] %v715
    %748 = vst [vmem:[#allocation5 + $0xc8] sm:$0xff] %v716
    %749 = vst [vmem:[#allocation5 + $0xd0] sm:$0xff] %v717
    %750 = vst [vmem:[#allocation5 + $0xd8] sm:$0xff] %v718
    %751 = vst [vmem:[#allocation5 + $0xe0] sm:$0xff] %v719
    %752 = vst [vmem:[#allocation5 + $0xe8] sm:$0xff] %v720
    %753 = vst [vmem:[#allocation5 + $0xf0] sm:$0xff] %v721
    %754 = vst [vmem:[#allocation5 + $0xf8] sm:$0xff] %v722
    // Predicated region
    $region18: #{tpu_custom_call.1} parent=1 // pred_check
      _
    $region19: #{tpu_custom_call.1} parent=1 // pred_check_branch
      %756 = sbr.rel (0) target = $region21
    $region20: #{tpu_custom_call.1} parent=1 // pred_region
      %s758 = ssub.s32 4096, 4096
      %759 = vsyncadd [#allocation4], %s758
      %s760 = sshll.u32 [#allocation5], 4
      %s761 = int_to_ptr.vmem [resolvable:$true] %s760
      %766 = dma.vmem_to_hbm [thread:$0]  %s761, 4096, %s3, [#allocation4], 256, 256, 16
    $region21: #{tpu_custom_call.1} parent=1 // pred_fallthru
      _
    // Predicated region
    $region22: #{tpu_custom_call.1} parent=1 // pred_check
      _
    $region23: #{tpu_custom_call.1} parent=1 // pred_check_branch
      %768 = sbr.rel (0) target = $region25
    $region24: #{tpu_custom_call.1} parent=1 // pred_region
      %769 = dma.done [#allocation4], 4096
    $region25: #{tpu_custom_call.1} parent=1 // pred_fallthru
      _
    %770 = vsyncpa [#allocation3], 1
    %771 = vsyncpa [#allocation4], 1

</llo_original>
